<compile_context>
chip_gen: v6e
topology: v6e:2x2x1
jax: 0.10.0
libtpu: 0.0.40
codegen_flags: <defaults>
</compile_context>

<pallas_src>
import functools

import jax
import jax.numpy as jnp
from jax.experimental import pallas as pl
from jax.experimental.pallas import tpu as pltpu

_LANE = 128  # feature axes are zero-padded to this for lane-dense loads/stores


def _pad2d(x, rows, cols):
    return jnp.zeros((rows, cols), x.dtype).at[: x.shape[0], : x.shape[1]].set(x)


def prepare_gat_params(params):
    """Pad / fold / cast the GAT parameters once, outside the jitted forward.

    params: [(W1_T, a1_src, a1_dst), (W2_T, a2_src, a2_dst)] with W_T = W.T of
            shape (F_in, F_out) and a_src/a_dst of shape (F_out, 1).

    Returns bf16 "augmented" weights of shape (FP, FP): columns [0, F_out) hold
    W^T, column F_out holds W^T.a_src and column F_out+1 holds W^T.a_dst, so
    the attention projections fall out of the layer matmul for free inside the
    existing 128-lane zero padding. Zero padding rows guarantee layer-1's extra
    output columns cannot contaminate layer 2.
    """
    (w1_t, a1_src, a1_dst), (w2_t, a2_src, a2_dst) = params
    f_in, f_out = w1_t.shape
    fp = max(_LANE,
             -(-f_in // _LANE) * _LANE,
             -(-(f_out + 2) // _LANE) * _LANE)

    def aug(w_t, a_src, a_dst):
        w_aug = jnp.concatenate([w_t, w_t @ a_src, w_t @ a_dst], axis=1)
        return _pad2d(w_aug, fp, fp).astype(jnp.bfloat16)

    return {"w1": aug(w1_t, a1_src, a1_dst),
            "w2": aug(w2_t, a2_src, a2_dst),
            "f_out": int(f_out)}


def _make_gat2_kernel(f_out):
    c1, c2 = f_out, f_out + 1  # folded attention-projection columns

    def kernel(h_ref, w1_ref, w2_ref, o_ref, h1_ref):
        # h_ref : (N, FP)  bf16 node features (zero beyond F_in)
        # wK_ref: (FP, FP) bf16 augmented weights
        # o_ref : (N, FP)  f32 layer-2 output (columns >= F_out are dropped)
        # h1_ref: (N, FP)  bf16 VMEM scratch holding the layer-1 output

        def layer(h_bf16, w_ref):
            # Linear (+ folded attention projections) on the MXU, f32 accumulate.
            wh = jnp.dot(h_bf16, w_ref[...], preferred_element_type=jnp.float32)
            # s1[i] = a_src . Wh[i],  s2[j] = a_dst . Wh[j]: static column slices.
            s1 = wh[:, c1:c1 + 1]                            # (N, 1)
            s2 = wh[:, c2:c2 + 1]                            # (N, 1)
            e = s1 + s2.T                                    # (N, N) logits
            e = jnp.where(e > 0, e, 0.01 * e)                # leaky_relu(0.01)
            # Row softmax (dim=1) with normalization deferred past the matmul.
            p = jnp.exp(e - jnp.max(e, axis=1, keepdims=True))
            denom = jnp.sum(p, axis=1, keepdims=True)        # (N, 1)
            acc = jnp.dot(p.astype(jnp.bfloat16), wh.astype(jnp.bfloat16),
                          preferred_element_type=jnp.float32)  # (N, FP)
            return acc * pl.reciprocal(denom, approx=True)   # EUP reciprocal

        h1_ref[...] = layer(h_ref[...], w1_ref).astype(jnp.bfloat16)
        # w2's padding rows at columns c1/c2 are zero, so layer-1's extra
        # (projection) columns in h1 cannot contaminate layer 2.
        o_ref[...] = layer(h1_ref[...], w2_ref)

    return kernel


@functools.partial(jax.jit, static_argnames=("f_out",))
def _gat_forward_padded(embs, w1_aug, w2_aug, *, f_out):
    n, f_in = embs.shape
    fp = w1_aug.shape[1]

    # Pad the per-call node features to lane-dense bf16 (zero padding is exact).
    h_p = jnp.zeros((n, fp), jnp.bfloat16).at[:, :f_in].set(
        embs.astype(jnp.bfloat16))

    # Advisory cost hint for the XLA scheduler.
    flops = 2 * (2 * n * fp * fp + 2 * n * n * fp + 6 * n * n)
    bytes_accessed = 2 * (h_p.size + w1_aug.size + w2_aug.size) + 4 * n * fp
    cost = pl.CostEstimate(flops=flops, transcendentals=2 * (n * n + n),
                           bytes_accessed=bytes_accessed)

    # Explicit scoped-VMEM budget: inputs/outputs (double-buffered), the bf16
    # inter-layer scratch, and the live f32/bf16 (N,N)/(N,FP) intermediates.
    resident = (2 * (2 * n * fp + 2 * fp * fp + 2 * fp * fp + 4 * n * fp)
                + 2 * n * fp            # h1 scratch (bf16)
                + 3 * 4 * n * n         # e / p (+ bf16 copy) logits
                + 4 * 4 * n * fp)       # wh / acc (+ bf16 copies)
    vmem_limit = int(min(max(2 * resident, 32 << 20), 100 << 20))

    out_p = pl.pallas_call(
        _make_gat2_kernel(f_out),
        out_shape=jax.ShapeDtypeStruct((n, fp), jnp.float32),
        in_specs=[
            pl.BlockSpec((n, fp), lambda: (0, 0)),
            pl.BlockSpec((fp, fp), lambda: (0, 0)),
            pl.BlockSpec((fp, fp), lambda: (0, 0)),
        ],
        out_specs=pl.BlockSpec((n, fp), lambda: (0, 0)),
        scratch_shapes=[pltpu.VMEM((n, fp), jnp.bfloat16)],
        compiler_params=pltpu.CompilerParams(vmem_limit_bytes=vmem_limit),
        cost_estimate=cost,
    )(h_p, w1_aug, w2_aug)

    # Drop the lane padding; final shape mirrors torch's (N, 1, F_out).
    return out_p[:, None, :f_out]


def gat_forward(embs, adj_matrices, prepared):
    """Matches GAT.forward(embs, adj_matrices).

    The adjacency matrices are only zipped with the layers in the reference
    and never used by its math, so they are ignored here as well.
    """
    del adj_matrices
    return _gat_forward_padded(embs, prepared["w1"], prepared["w2"],
                               f_out=prepared["f_out"])


# ---------------- pure-JAX references for verification ----------------
def _gat_forward_matched_ref(embs, prepared):
    """Mirrors the kernel's numeric recipe (bf16 MXU inputs, folded projection
    columns, deferred normalization, bf16 inter-layer handoff); the only delta
    vs. the kernel is the exact (non-EUP-approx) reciprocal."""
    f_out = prepared["f_out"]
    fp = prepared["w1"].shape[1]
    n, f_in = embs.shape
    h = jnp.zeros((n, fp), jnp.bfloat16).at[:, :f_in].set(
        embs.astype(jnp.bfloat16))

    def layer(h_bf16, w_aug):
        wh = jnp.dot(h_bf16, w_aug, preferred_element_type=jnp.float32)
        s1 = wh[:, f_out:f_out + 1]
        s2 = wh[:, f_out + 1:f_out + 2]
        e = s1 + s2.T
        e = jnp.where(e > 0, e, 0.01 * e)
        p = jnp.exp(e - jnp.max(e, axis=1, keepdims=True))
        acc = jnp.dot(p.astype(jnp.bfloat16), wh.astype(jnp.bfloat16),
                      preferred_element_type=jnp.float32)
        return acc / jnp.sum(p, axis=1, keepdims=True)

    h1 = layer(h, prepared["w1"]).astype(jnp.bfloat16)
    out = layer(h1, prepared["w2"])
    return out[:, None, :f_out]


def _gat_forward_f32_ref(embs, params):
    """Pure-f32 PyTorch-semantics reference."""
    h = embs
    for (w_t, a_src, a_dst) in params:
        wh = h @ w_t
        e = wh @ a_src + (wh @ a_dst).T
        e = jnp.where(e > 0, e, 0.01 * e)
        att = jax.nn.softmax(e, axis=1)
        h = att @ wh
    return h[:, None, :]


if __name__ == "__main__":
    N = 8              # number of graph nodes
    IN_FEATURES = 16
    OUT_FEATURES = 32

    key = jax.random.PRNGKey(0)
    k_emb, k_adj, k_w1, k_a1, k_w2, k_a2 = jax.random.split(key, 6)

    embs = jax.random.normal(k_emb, (N, IN_FEATURES), dtype=jnp.float32)
    adj_matrices = [
        (jax.random.uniform(k_adj, (N, N)) > 0.5).astype(jnp.float32),
        (jax.random.uniform(k_adj, (N, N)) > 0.5).astype(jnp.float32),
    ]

    # Deterministic synthetic parameters (shapes follow nn.Linear in __init__).
    # Layer 1: W (OUT, IN) -> stored transposed (IN, OUT); a (1, 2*OUT) -> split.
    w1_t = 0.1 * jax.random.normal(k_w1, (IN_FEATURES, OUT_FEATURES), jnp.float32)
    a1_full = 0.1 * jax.random.normal(k_a1, (2 * OUT_FEATURES, 1), jnp.float32)
    # Layer 2: W (OUT, OUT); a (1, 2*OUT).
    w2_t = 0.1 * jax.random.normal(k_w2, (OUT_FEATURES, OUT_FEATURES), jnp.float32)
    a2_full = 0.1 * jax.random.normal(k_a2, (2 * OUT_FEATURES, 1), jnp.float32)

    params = [
        (w1_t, a1_full[:OUT_FEATURES, :], a1_full[OUT_FEATURES:, :]),
        (w2_t, a2_full[:OUT_FEATURES, :], a2_full[OUT_FEATURES:, :]),
    ]

    prepared = prepare_gat_params(params)   # pad / fold / cast once, outside jit
    out = gat_forward(embs, adj_matrices, prepared)
    out = jax.block_until_ready(out)
    assert out.shape == (N, 1, OUT_FEATURES), out.shape

    # Tight check vs. the kernel-matched reference (delta = approx reciprocal).
    ref_matched = _gat_forward_matched_ref(embs, prepared)
    err_m = float(jnp.max(jnp.abs(out - ref_matched)))
    assert jnp.allclose(out, ref_matched, atol=5e-3, rtol=5e-3), err_m

    # Looser check vs. the pure-f32 (PyTorch-semantics) reference: the only
    # deltas are bf16 MXU operands and the approximate EUP reciprocal.
    ref_f32 = _gat_forward_f32_ref(embs, params)
    err_f = float(jnp.max(jnp.abs(out - ref_f32)))
    assert jnp.allclose(out, ref_f32, atol=2e-2, rtol=2e-2), err_f

    print("KERNEL_OK")
</pallas_src>

<mosaic_0001>
module attributes {stable_mosaic.version = 11 : i64} {
  func.func @kernel(%arg0: memref<8x128xbf16, #tpu.memory_space<vmem>>, %arg1: memref<128x128xbf16, #tpu.memory_space<vmem>>, %arg2: memref<128x128xbf16, #tpu.memory_space<vmem>>, %arg3: memref<8x128xf32, #tpu.memory_space<vmem>>, %arg4: memref<8x128xbf16, #tpu.memory_space<vmem>>) attributes {dimension_semantics = [], scalar_prefetch = 0 : i64, scratch_operands = 1 : i64, tpu.core_type = #tpu.core_type<tc>} {
    %c0 = arith.constant 0 : index
    %c0_0 = arith.constant 0 : index
    %0 = vector.load %arg0[%c0, %c0_0] : memref<8x128xbf16, #tpu.memory_space<vmem>>, vector<8x128xbf16>
    %c0_1 = arith.constant 0 : index
    %c0_2 = arith.constant 0 : index
    %1 = vector.load %arg1[%c0_1, %c0_2] : memref<128x128xbf16, #tpu.memory_space<vmem>>, vector<128x128xbf16>
    %cst = arith.constant dense<0.000000e+00> : vector<8x128xf32>
    %2 = tpu.matmul %0, %1, %cst {dimension_numbers = #tpu.dot_dimension_numbers<[1], [0], [0], [1], [0, 0, 1, 1], [], []>} : vector<8x128xbf16>, vector<128x128xbf16>, vector<8x128xf32> -> vector<8x128xf32>
    %3 = vector.extract_strided_slice %2 {offsets = [0, 32], sizes = [8, 1], strides = [1, 1]} : vector<8x128xf32> to vector<8x1xf32>
    %4 = vector.extract_strided_slice %2 {offsets = [0, 33], sizes = [8, 1], strides = [1, 1]} : vector<8x128xf32> to vector<8x1xf32>
    %5 = tpu.transpose %4, [1, 0] : vector<8x1xf32> -> vector<1x8xf32>
    %6 = vector.broadcast %3 : vector<8x1xf32> to vector<8x8xf32>
    %7 = vector.broadcast %5 : vector<1x8xf32> to vector<8x8xf32>
    %8 = arith.addf %6, %7 : vector<8x8xf32>
    %cst_3 = arith.constant 0.000000e+00 : f32
    %9 = vector.broadcast %cst_3 : f32 to vector<8x8xf32>
    %10 = arith.cmpf ogt, %8, %9 : vector<8x8xf32>
    %cst_4 = arith.constant 0.00999999977 : f32
    %11 = vector.broadcast %cst_4 : f32 to vector<8x8xf32>
    %12 = arith.mulf %11, %8 : vector<8x8xf32>
    %13 = arith.select %10, %8, %12 : vector<8x8xi1>, vector<8x8xf32>
    %cst_5 = arith.constant dense<0xFF800000> : vector<8xf32>
    %14 = vector.multi_reduction <maximumf>, %13, %cst_5 [1] : vector<8x8xf32> to vector<8xf32>
    %15 = vector.shape_cast %14 : vector<8xf32> to vector<8x1xf32>
    %16 = vector.broadcast %15 : vector<8x1xf32> to vector<8x8xf32>
    %17 = arith.subf %13, %16 : vector<8x8xf32>
    %18 = math.exp %17 : vector<8x8xf32>
    %cst_6 = arith.constant dense<0.000000e+00> : vector<8xf32>
    %19 = vector.multi_reduction <add>, %18, %cst_6 [1] : vector<8x8xf32> to vector<8xf32>
    %20 = vector.shape_cast %19 : vector<8xf32> to vector<8x1xf32>
    %21 = arith.truncf %18 : vector<8x8xf32> to vector<8x8xbf16>
    %22 = arith.truncf %2 : vector<8x128xf32> to vector<8x128xbf16>
    %cst_7 = arith.constant dense<0.000000e+00> : vector<8x128xf32>
    %23 = tpu.matmul %21, %22, %cst_7 {dimension_numbers = #tpu.dot_dimension_numbers<[1], [0], [0], [1], [0, 0, 1, 1], [], []>} : vector<8x8xbf16>, vector<8x128xbf16>, vector<8x128xf32> -> vector<8x128xf32>
    %24 = tpu.reciprocal %20 {approx = true} : vector<8x1xf32> -> vector<8x1xf32>
    %25 = vector.broadcast %24 : vector<8x1xf32> to vector<8x128xf32>
    %26 = arith.mulf %23, %25 : vector<8x128xf32>
    %27 = arith.truncf %26 : vector<8x128xf32> to vector<8x128xbf16>
    %c0_8 = arith.constant 0 : index
    %c0_9 = arith.constant 0 : index
    %28 = vector.load %arg4[%c0_8, %c0_9] : memref<8x128xbf16, #tpu.memory_space<vmem>>, vector<8x128xbf16>
    tpu.vector_store %arg4[%c0_8, %c0_9], %27 {strides = array<i32>} : memref<8x128xbf16, #tpu.memory_space<vmem>>, vector<8x128xbf16>,
    %c0_10 = arith.constant 0 : index
    %c0_11 = arith.constant 0 : index
    %29 = vector.load %arg4[%c0_10, %c0_11] : memref<8x128xbf16, #tpu.memory_space<vmem>>, vector<8x128xbf16>
    %c0_12 = arith.constant 0 : index
    %c0_13 = arith.constant 0 : index
    %30 = vector.load %arg2[%c0_12, %c0_13] : memref<128x128xbf16, #tpu.memory_space<vmem>>, vector<128x128xbf16>
    %cst_14 = arith.constant dense<0.000000e+00> : vector<8x128xf32>
    %31 = tpu.matmul %29, %30, %cst_14 {dimension_numbers = #tpu.dot_dimension_numbers<[1], [0], [0], [1], [0, 0, 1, 1], [], []>} : vector<8x128xbf16>, vector<128x128xbf16>, vector<8x128xf32> -> vector<8x128xf32>
    %32 = vector.extract_strided_slice %31 {offsets = [0, 32], sizes = [8, 1], strides = [1, 1]} : vector<8x128xf32> to vector<8x1xf32>
    %33 = vector.extract_strided_slice %31 {offsets = [0, 33], sizes = [8, 1], strides = [1, 1]} : vector<8x128xf32> to vector<8x1xf32>
    %34 = tpu.transpose %33, [1, 0] : vector<8x1xf32> -> vector<1x8xf32>
    %35 = vector.broadcast %32 : vector<8x1xf32> to vector<8x8xf32>
    %36 = vector.broadcast %34 : vector<1x8xf32> to vector<8x8xf32>
    %37 = arith.addf %35, %36 : vector<8x8xf32>
    %cst_15 = arith.constant 0.000000e+00 : f32
    %38 = vector.broadcast %cst_15 : f32 to vector<8x8xf32>
    %39 = arith.cmpf ogt, %37, %38 : vector<8x8xf32>
    %cst_16 = arith.constant 0.00999999977 : f32
    %40 = vector.broadcast %cst_16 : f32 to vector<8x8xf32>
    %41 = arith.mulf %40, %37 : vector<8x8xf32>
    %42 = arith.select %39, %37, %41 : vector<8x8xi1>, vector<8x8xf32>
    %cst_17 = arith.constant dense<0xFF800000> : vector<8xf32>
    %43 = vector.multi_reduction <maximumf>, %42, %cst_17 [1] : vector<8x8xf32> to vector<8xf32>
    %44 = vector.shape_cast %43 : vector<8xf32> to vector<8x1xf32>
    %45 = vector.broadcast %44 : vector<8x1xf32> to vector<8x8xf32>
    %46 = arith.subf %42, %45 : vector<8x8xf32>
    %47 = math.exp %46 : vector<8x8xf32>
    %cst_18 = arith.constant dense<0.000000e+00> : vector<8xf32>
    %48 = vector.multi_reduction <add>, %47, %cst_18 [1] : vector<8x8xf32> to vector<8xf32>
    %49 = vector.shape_cast %48 : vector<8xf32> to vector<8x1xf32>
    %50 = arith.truncf %47 : vector<8x8xf32> to vector<8x8xbf16>
    %51 = arith.truncf %31 : vector<8x128xf32> to vector<8x128xbf16>
    %cst_19 = arith.constant dense<0.000000e+00> : vector<8x128xf32>
    %52 = tpu.matmul %50, %51, %cst_19 {dimension_numbers = #tpu.dot_dimension_numbers<[1], [0], [0], [1], [0, 0, 1, 1], [], []>} : vector<8x8xbf16>, vector<8x128xbf16>, vector<8x128xf32> -> vector<8x128xf32>
    %53 = tpu.reciprocal %49 {approx = true} : vector<8x1xf32> -> vector<8x1xf32>
    %54 = vector.broadcast %53 : vector<8x1xf32> to vector<8x128xf32>
    %55 = arith.mulf %52, %54 : vector<8x128xf32>
    %c0_20 = arith.constant 0 : index
    %c0_21 = arith.constant 0 : index
    %56 = vector.load %arg3[%c0_20, %c0_21] : memref<8x128xf32, #tpu.memory_space<vmem>>, vector<8x128xf32>
    tpu.vector_store %arg3[%c0_20, %c0_21], %55 {strides = array<i32>} : memref<8x128xf32, #tpu.memory_space<vmem>>, vector<8x128xf32>,
    return
  }
}

</mosaic_0001>

<llo_original>
// kernel: _gat_forward_padded.1
$region0: #{_gat_forward_padded.1}
  #allocation0 [shape = 'u32[]', space=smem, size = 0x4, offset = 0x4, fixed_abs, tag = 'smem constant byte address 0x4 - core index']
  #allocation1 [shape = 'u32[144,128]{1,0:T(1,128)}', space=vmem, size = 0x12000, scoped, tag = 'internal scratch']
  #allocation2 [shape = 'bf16[8,128]{1,0:T(8,128)(2,1)}', space=vmem, size = 0x800, scoped, tag = 'scratch operand']
  %s0 = inlined_call_operand.vmem [shape: bf16[8,128], index: 0, kind: input, shape index: {}]
  %s1 = inlined_call_operand.hbm [shape: bf16[128,128], index: 1, kind: input, shape index: {}]
  %s2 = inlined_call_operand.hbm [shape: bf16[128,128], index: 2, kind: input, shape index: {}]
  %s3 = inlined_call_operand.hbm [shape: f32[8,128], index: 3, kind: output, shape index: {}]
  %s4 = sld [smem:[#allocation0]]
  $region30: #{_gat_forward_padded.1} parent=0
    _
  %s6 = ssub.s32 1, %s4
  %s7 = scalar_select 0, %s6, %s4
  $region1: #{_gat_forward_padded.1} parent=0
    #allocation3 [shape = 'u8[32768]{0}', space=vmem, size = 0x8000, scoped, tag = 'input window, operand 1, single buffered']
    #allocation4 [shape = 's32[1]{0}', space=sflag, size = 0x4, scoped, tag = 'scoped memory for _gat_forward_padded.1']
    #allocation5 [shape = 's32[1]{0}', space=sflag, size = 0x4, scoped, tag = 'scoped memory for _gat_forward_padded.1']
    #allocation6 [shape = 'u8[32768]{0}', space=vmem, size = 0x8000, scoped, tag = 'input window, operand 2, single buffered']
    #allocation7 [shape = 's32[1]{0}', space=sflag, size = 0x4, scoped, tag = 'scoped memory for _gat_forward_padded.1']
    #allocation8 [shape = 'u8[4096]{0}', space=vmem, size = 0x1000, scoped, tag = 'output window, operand 0, single buffered']
    %8 = vsyncpa [#allocation4], 0
    %9 = vsyncpa [#allocation7], 0
    %10 = vsyncpa [#allocation5], 0
    // Predicated region
    $region2: #{_gat_forward_padded.1} parent=1 // pred_check
      _
    $region3: #{_gat_forward_padded.1} parent=1 // pred_check_branch
      %12 = sbr.rel (0) target = $region5
    $region4: #{_gat_forward_padded.1} parent=1 // pred_region
      _
    $region5: #{_gat_forward_padded.1} parent=1 // pred_fallthru
      _
    // Predicated region
    $region6: #{_gat_forward_padded.1} parent=1 // pred_check
      _
    $region7: #{_gat_forward_padded.1} parent=1 // pred_check_branch
      %14 = sbr.rel (0) target = $region9
    $region8: #{_gat_forward_padded.1} parent=1 // pred_region
      %s16 = ssub.s32 1024, 1024
      %17 = vsyncadd [#allocation4], %s16
      %s18 = sshll.u32 [#allocation3], 4
      %s19 = int_to_ptr.vmem [resolvable:$true] %s18
      %24 = dma.hbm_to_vmem [thread:$0]  %s1, 1024, %s19, [#allocation4], 64, 64, 4
    $region9: #{_gat_forward_padded.1} parent=1 // pred_fallthru
      _
    // Predicated region
    $region10: #{_gat_forward_padded.1} parent=1 // pred_check
      _
    $region11: #{_gat_forward_padded.1} parent=1 // pred_check_branch
      %26 = sbr.rel (0) target = $region13
    $region12: #{_gat_forward_padded.1} parent=1 // pred_region
      %s28 = ssub.s32 1024, 1024
      %29 = vsyncadd [#allocation7], %s28
      %s30 = sshll.u32 [#allocation6], 4
      %s31 = int_to_ptr.vmem [resolvable:$true] %s30
      %36 = dma.hbm_to_vmem [thread:$0]  %s2, 1024, %s31, [#allocation7], 64, 64, 4
    $region13: #{_gat_forward_padded.1} parent=1 // pred_fallthru
      _
    // Predicated region
    $region14: #{_gat_forward_padded.1} parent=1 // pred_check
      _
    $region15: #{_gat_forward_padded.1} parent=1 // pred_check_branch
      %38 = sbr.rel (0) target = $region17
    $region16: #{_gat_forward_padded.1} parent=1 // pred_region
      %39 = dma.done [#allocation4], 1024
    $region17: #{_gat_forward_padded.1} parent=1 // pred_fallthru
      _
    // Predicated region
    $region18: #{_gat_forward_padded.1} parent=1 // pred_check
      _
    $region19: #{_gat_forward_padded.1} parent=1 // pred_check_branch
      %41 = sbr.rel (0) target = $region21
    $region20: #{_gat_forward_padded.1} parent=1 // pred_region
      %42 = dma.done [#allocation7], 1024
    $region21: #{_gat_forward_padded.1} parent=1 // pred_fallthru
      _
    %v44 = vld [vmem:[%s0] sm:$0xf]
    %v45 = vld [vmem:[#allocation3] sm:$0xf]
    %v46 = vld [vmem:[#allocation3 + $0x4] sm:$0xf]
    %v47 = vld [vmem:[#allocation3 + $0x8] sm:$0xf]
    %v48 = vld [vmem:[#allocation3 + $0xc] sm:$0xf]
    %v49 = vld [vmem:[#allocation3 + $0x10] sm:$0xf]
    %v50 = vld [vmem:[#allocation3 + $0x14] sm:$0xf]
    %v51 = vld [vmem:[#allocation3 + $0x18] sm:$0xf]
    %v52 = vld [vmem:[#allocation3 + $0x1c] sm:$0xf]
    %v53 = vld [vmem:[#allocation3 + $0x20] sm:$0xf]
    %v54 = vld [vmem:[#allocation3 + $0x24] sm:$0xf]
    %v55 = vld [vmem:[#allocation3 + $0x28] sm:$0xf]
    %v56 = vld [vmem:[#allocation3 + $0x2c] sm:$0xf]
    %v57 = vld [vmem:[#allocation3 + $0x30] sm:$0xf]
    %v58 = vld [vmem:[#allocation3 + $0x34] sm:$0xf]
    %v59 = vld [vmem:[#allocation3 + $0x38] sm:$0xf]
    %v60 = vld [vmem:[#allocation3 + $0x3c] sm:$0xf]
    %v77 = vunpack.c.l.b16 %v45
    %v78 = vunpack.c.l.b16 %v46
    %v79 = vunpack.c.l.b16 %v47
    %v80 = vunpack.c.l.b16 %v48
    %v81 = vunpack.c.l.b16 %v49
    %v82 = vunpack.c.l.b16 %v50
    %v83 = vunpack.c.l.b16 %v51
    %v84 = vunpack.c.l.b16 %v52
    %v85 = vunpack.c.l.b16 %v53
    %v86 = vunpack.c.l.b16 %v54
    %v87 = vunpack.c.l.b16 %v55
    %v88 = vunpack.c.l.b16 %v56
    %v89 = vunpack.c.l.b16 %v57
    %v90 = vunpack.c.l.b16 %v58
    %v91 = vunpack.c.l.b16 %v59
    %v92 = vunpack.c.l.b16 %v60
    %v93 = vpack.c.b16 %v78, %v77
    %v94 = vpack.c.b16 %v80, %v79
    %v95 = vpack.c.b16 %v82, %v81
    %v96 = vpack.c.b16 %v84, %v83
    %v97 = vpack.c.b16 %v86, %v85
    %v98 = vpack.c.b16 %v88, %v87
    %v99 = vpack.c.b16 %v90, %v89
    %v100 = vpack.c.b16 %v92, %v91
    %109 = vmatprep.subr.bf16.mxu0 0
    %110 = vmatpush1.bf16.msra.mxu0 %v100
    %111 = vmatprep.subr.bf16.mxu0 0
    %112 = vmatpush1.bf16.msra.mxu0 %v99
    %113 = vmatprep.subr.bf16.mxu0 0
    %114 = vmatpush1.bf16.msra.mxu0 %v98
    %115 = vmatprep.subr.bf16.mxu0 0
    %116 = vmatpush1.bf16.msra.mxu0 %v97
    %117 = vmatprep.subr.bf16.mxu0 0
    %118 = vmatpush1.bf16.msra.mxu0 %v96
    %119 = vmatprep.subr.bf16.mxu0 0
    %120 = vmatpush1.bf16.msra.mxu0 %v95
    %121 = vmatprep.subr.bf16.mxu0 0
    %122 = vmatpush1.bf16.msra.mxu0 %v94
    %123 = vmatprep.subr.bf16.mxu0 0
    %124 = vmatpush1.bf16.msra.mxu0 %v93
    %125 = vmatprep.subr.bf16.mxu0 0
    %126 = vmatpush2.bf16.msra.mxu0 0
    %127 = vmatprep.subr.bf16.mxu0 0
    %128 = vmatpush2.bf16.msra.mxu0 0
    %129 = vmatprep.subr.bf16.mxu0 0
    %130 = vmatpush2.bf16.msra.mxu0 0
    %131 = vmatprep.subr.bf16.mxu0 0
    %132 = vmatpush2.bf16.msra.mxu0 0
    %133 = vmatprep.subr.bf16.mxu0 0
    %134 = vmatpush2.bf16.msra.mxu0 0
    %135 = vmatprep.subr.bf16.mxu0 0
    %136 = vmatpush2.bf16.msra.mxu0 0
    %137 = vmatprep.subr.bf16.mxu0 0
    %138 = vmatpush2.bf16.msra.mxu0 0
    %139 = vmatprep.subr.bf16.mxu0 0
    %140 = vmatpush2.bf16.msra.mxu0 0
    %141 = vmatprep.mubr.bf16.mxu0 0
    %142 = vmatmul.mubr.bf16.gmra.mxu0 %v44
    %v143 = vpop.f32.mrf.mxu0
    %v144 = vadd.f32 0.0, %v143
    %v145 = vpop.f32.mrf.mxu0
    %v146 = vpop.f32.mrf.mxu0
    %v147 = vpop.f32.mrf.mxu0
    %148 = vdwg.mxu0
    %150 = vrot.lane.b32.xlu0 %v144, 95
    %v151 = vpop.permute.xlu0 %150
    %153 = vxpose.xlu0.b32.start [1/16] %v151, 128
    %154 = vxpose.xlu0.b32.cont [2/16] 0.0, 128
    %155 = vxpose.xlu0.b32.cont [3/16] 0.0, 128
    %156 = vxpose.xlu0.b32.cont [4/16] 0.0, 128
    %157 = vxpose.xlu0.b32.cont [5/16] 0.0, 128
    %158 = vxpose.xlu0.b32.cont [6/16] 0.0, 128
    %159 = vxpose.xlu0.b32.cont [7/16] 0.0, 128
    %160 = vxpose.xlu0.b32.cont [8/16] 0.0, 128
    %161 = vxpose.xlu0.b32.cont [9/16] 0.0, 128
    %162 = vxpose.xlu0.b32.cont [10/16] 0.0, 128
    %163 = vxpose.xlu0.b32.cont [11/16] 0.0, 128
    %164 = vxpose.xlu0.b32.cont [12/16] 0.0, 128
    %165 = vxpose.xlu0.b32.cont [13/16] 0.0, 128
    %166 = vxpose.xlu0.b32.cont [14/16] 0.0, 128
    %167 = vxpose.xlu0.b32.cont [15/16] 0.0, 128
    %168 = vxpose.xlu0.b32.end [16/16] 0.0, 128
    %v169 = vpop.trf.xlu0
    %v170 = vpop.trf.xlu0
    %v171 = vpop.trf.xlu0
    %v172 = vpop.trf.xlu0
    %v173 = vpop.trf.xlu0
    %v174 = vpop.trf.xlu0
    %v175 = vpop.trf.xlu0
    %v176 = vpop.trf.xlu0
    %v177 = vpop.trf.xlu0
    %v178 = vpop.trf.xlu0
    %v179 = vpop.trf.xlu0
    %v180 = vpop.trf.xlu0
    %v181 = vpop.trf.xlu0
    %v182 = vpop.trf.xlu0
    %v183 = vpop.trf.xlu0
    %v184 = vpop.trf.xlu0
    %185 = vset.pattern.permute.xlu0 32
    %186 = vperm.xlu0 %185, %v144
    %v187 = vpop.permute.xlu0 %186
    %v189 = vlaneseq
    %v190 = vshrl.u32 %v189, 7
    %v191 = vsub.s32 0, %v190
    %v192 = vrot.slane %v169, %v191
    %v193 = vadd.f32 %v187, %v192
    %vm194 = vcmp.gt.f32.partialorder %v193, 0.0
    %v195 = vmul.f32 %v193, 0.01
    %v196 = vsel %vm194, %v193, %v195
    %vm197 = vcmask 64512
    %v198 = vsel %vm197, %v196, -inf
    %199 = vmax.xlane.f32.xlu0 %v198
    %v200 = vpop.xlane.xlu0 %199
    %v201 = vsub.f32 %v196, %v200
    %v202 = vmul.f32 %v201, 1.442695
    %v203 = vpow.pop %v202
    %v204 = vsel %vm197, %v203, 0.0
    %205 = vadd.xlane.f32.xlu0 %v204
    %v206 = vpop.xlane.xlu0 %205
    %v207 = vpack.c.bf16 %v203, %v203
    %v208 = vpack.c.bf16 %v144, %v144
    %v210 = vsel %vm197, %v207, 0
    %vm212 = vcmask 1043456
    %v214 = vsel %vm212, %v208, 0
    %216 = vmatprep.subr.bf16.mxu0 0
    %217 = vmatpush1.bf16.msra.mxu0 0
    %218 = vmatprep.subr.bf16.mxu0 0
    %219 = vmatpush1.bf16.msra.mxu0 0
    %220 = vmatprep.subr.bf16.mxu0 0
    %221 = vmatpush1.bf16.msra.mxu0 0
    %222 = vmatprep.subr.bf16.mxu0 0
    %223 = vmatpush1.bf16.msra.mxu0 0
    %224 = vmatprep.subr.bf16.mxu0 0
    %225 = vmatpush1.bf16.msra.mxu0 0
    %226 = vmatprep.subr.bf16.mxu0 0
    %227 = vmatpush1.bf16.msra.mxu0 0
    %228 = vmatprep.subr.bf16.mxu0 0
    %229 = vmatpush1.bf16.msra.mxu0 0
    %230 = vmatprep.subr.bf16.mxu0 0
    %231 = vmatpush1.bf16.msra.mxu0 %v214
    %232 = vmatprep.subr.bf16.mxu0 0
    %233 = vmatpush2.bf16.msra.mxu0 0
    %234 = vmatprep.subr.bf16.mxu0 0
    %235 = vmatpush2.bf16.msra.mxu0 0
    %236 = vmatprep.subr.bf16.mxu0 0
    %237 = vmatpush2.bf16.msra.mxu0 0
    %238 = vmatprep.subr.bf16.mxu0 0
    %239 = vmatpush2.bf16.msra.mxu0 0
    %240 = vmatprep.subr.bf16.mxu0 0
    %241 = vmatpush2.bf16.msra.mxu0 0
    %242 = vmatprep.subr.bf16.mxu0 0
    %243 = vmatpush2.bf16.msra.mxu0 0
    %244 = vmatprep.subr.bf16.mxu0 0
    %245 = vmatpush2.bf16.msra.mxu0 0
    %246 = vmatprep.subr.bf16.mxu0 0
    %247 = vmatpush2.bf16.msra.mxu0 0
    %248 = vmatprep.mubr.bf16.mxu0 0
    %249 = vmatmul.mubr.bf16.gmra.mxu0 %v210
    %v250 = vpop.f32.mrf.mxu0
    %v251 = vadd.f32 0.0, %v250
    %v252 = vpop.f32.mrf.mxu0
    %v253 = vpop.f32.mrf.mxu0
    %v254 = vpop.f32.mrf.mxu0
    %255 = vdwg.mxu0
    %v256 = vrcp.pop %v206
    %v257 = vmul.f32 %v251, %v256
    %v258 = vpack.c.bf16 %v257, %v257
    %259 = vst [vmem:[#allocation2] sm:$0xf] %v258
    %v260 = vld [vmem:[#allocation2] sm:$0xf]
    %v261 = vld [vmem:[#allocation6] sm:$0xf]
    %v262 = vld [vmem:[#allocation6 + $0x4] sm:$0xf]
    %v263 = vld [vmem:[#allocation6 + $0x8] sm:$0xf]
    %v264 = vld [vmem:[#allocation6 + $0xc] sm:$0xf]
    %v265 = vld [vmem:[#allocation6 + $0x10] sm:$0xf]
    %v266 = vld [vmem:[#allocation6 + $0x14] sm:$0xf]
    %v267 = vld [vmem:[#allocation6 + $0x18] sm:$0xf]
    %v268 = vld [vmem:[#allocation6 + $0x1c] sm:$0xf]
    %v269 = vld [vmem:[#allocation6 + $0x20] sm:$0xf]
    %v270 = vld [vmem:[#allocation6 + $0x24] sm:$0xf]
    %v271 = vld [vmem:[#allocation6 + $0x28] sm:$0xf]
    %v272 = vld [vmem:[#allocation6 + $0x2c] sm:$0xf]
    %v273 = vld [vmem:[#allocation6 + $0x30] sm:$0xf]
    %v274 = vld [vmem:[#allocation6 + $0x34] sm:$0xf]
    %v275 = vld [vmem:[#allocation6 + $0x38] sm:$0xf]
    %v276 = vld [vmem:[#allocation6 + $0x3c] sm:$0xf]
    %v293 = vunpack.c.l.b16 %v261
    %v294 = vunpack.c.l.b16 %v262
    %v295 = vunpack.c.l.b16 %v263
    %v296 = vunpack.c.l.b16 %v264
    %v297 = vunpack.c.l.b16 %v265
    %v298 = vunpack.c.l.b16 %v266
    %v299 = vunpack.c.l.b16 %v267
    %v300 = vunpack.c.l.b16 %v268
    %v301 = vunpack.c.l.b16 %v269
    %v302 = vunpack.c.l.b16 %v270
    %v303 = vunpack.c.l.b16 %v271
    %v304 = vunpack.c.l.b16 %v272
    %v305 = vunpack.c.l.b16 %v273
    %v306 = vunpack.c.l.b16 %v274
    %v307 = vunpack.c.l.b16 %v275
    %v308 = vunpack.c.l.b16 %v276
    %v309 = vpack.c.b16 %v294, %v293
    %v310 = vpack.c.b16 %v296, %v295
    %v311 = vpack.c.b16 %v298, %v297
    %v312 = vpack.c.b16 %v300, %v299
    %v313 = vpack.c.b16 %v302, %v301
    %v314 = vpack.c.b16 %v304, %v303
    %v315 = vpack.c.b16 %v306, %v305
    %v316 = vpack.c.b16 %v308, %v307
    %325 = vmatprep.subr.bf16.mxu0 0
    %326 = vmatpush1.bf16.msra.mxu0 %v316
    %327 = vmatprep.subr.bf16.mxu0 0
    %328 = vmatpush1.bf16.msra.mxu0 %v315
    %329 = vmatprep.subr.bf16.mxu0 0
    %330 = vmatpush1.bf16.msra.mxu0 %v314
    %331 = vmatprep.subr.bf16.mxu0 0
    %332 = vmatpush1.bf16.msra.mxu0 %v313
    %333 = vmatprep.subr.bf16.mxu0 0
    %334 = vmatpush1.bf16.msra.mxu0 %v312
    %335 = vmatprep.subr.bf16.mxu0 0
    %336 = vmatpush1.bf16.msra.mxu0 %v311
    %337 = vmatprep.subr.bf16.mxu0 0
    %338 = vmatpush1.bf16.msra.mxu0 %v310
    %339 = vmatprep.subr.bf16.mxu0 0
    %340 = vmatpush1.bf16.msra.mxu0 %v309
    %341 = vmatprep.subr.bf16.mxu0 0
    %342 = vmatpush2.bf16.msra.mxu0 0
    %343 = vmatprep.subr.bf16.mxu0 0
    %344 = vmatpush2.bf16.msra.mxu0 0
    %345 = vmatprep.subr.bf16.mxu0 0
    %346 = vmatpush2.bf16.msra.mxu0 0
    %347 = vmatprep.subr.bf16.mxu0 0
    %348 = vmatpush2.bf16.msra.mxu0 0
    %349 = vmatprep.subr.bf16.mxu0 0
    %350 = vmatpush2.bf16.msra.mxu0 0
    %351 = vmatprep.subr.bf16.mxu0 0
    %352 = vmatpush2.bf16.msra.mxu0 0
    %353 = vmatprep.subr.bf16.mxu0 0
    %354 = vmatpush2.bf16.msra.mxu0 0
    %355 = vmatprep.subr.bf16.mxu0 0
    %356 = vmatpush2.bf16.msra.mxu0 0
    %357 = vmatprep.mubr.bf16.mxu0 0
    %358 = vmatmul.mubr.bf16.gmra.mxu0 %v260
    %v359 = vpop.f32.mrf.mxu0
    %v360 = vadd.f32 0.0, %v359
    %v361 = vpop.f32.mrf.mxu0
    %v362 = vpop.f32.mrf.mxu0
    %v363 = vpop.f32.mrf.mxu0
    %364 = vdwg.mxu0
    %366 = vrot.lane.b32.xlu0 %v360, 95
    %v367 = vpop.permute.xlu0 %366
    %369 = vxpose.xlu0.b32.start [1/16] %v367, 128
    %370 = vxpose.xlu0.b32.cont [2/16] 0.0, 128
    %371 = vxpose.xlu0.b32.cont [3/16] 0.0, 128
    %372 = vxpose.xlu0.b32.cont [4/16] 0.0, 128
    %373 = vxpose.xlu0.b32.cont [5/16] 0.0, 128
    %374 = vxpose.xlu0.b32.cont [6/16] 0.0, 128
    %375 = vxpose.xlu0.b32.cont [7/16] 0.0, 128
    %376 = vxpose.xlu0.b32.cont [8/16] 0.0, 128
    %377 = vxpose.xlu0.b32.cont [9/16] 0.0, 128
    %378 = vxpose.xlu0.b32.cont [10/16] 0.0, 128
    %379 = vxpose.xlu0.b32.cont [11/16] 0.0, 128
    %380 = vxpose.xlu0.b32.cont [12/16] 0.0, 128
    %381 = vxpose.xlu0.b32.cont [13/16] 0.0, 128
    %382 = vxpose.xlu0.b32.cont [14/16] 0.0, 128
    %383 = vxpose.xlu0.b32.cont [15/16] 0.0, 128
    %384 = vxpose.xlu0.b32.end [16/16] 0.0, 128
    %v385 = vpop.trf.xlu0
    %v386 = vpop.trf.xlu0
    %v387 = vpop.trf.xlu0
    %v388 = vpop.trf.xlu0
    %v389 = vpop.trf.xlu0
    %v390 = vpop.trf.xlu0
    %v391 = vpop.trf.xlu0
    %v392 = vpop.trf.xlu0
    %v393 = vpop.trf.xlu0
    %v394 = vpop.trf.xlu0
    %v395 = vpop.trf.xlu0
    %v396 = vpop.trf.xlu0
    %v397 = vpop.trf.xlu0
    %v398 = vpop.trf.xlu0
    %v399 = vpop.trf.xlu0
    %v400 = vpop.trf.xlu0
    %401 = vset.pattern.permute.xlu0 32
    %402 = vperm.xlu0 %401, %v360
    %v403 = vpop.permute.xlu0 %402
    %v405 = vlaneseq
    %v406 = vshrl.u32 %v405, 7
    %v407 = vsub.s32 0, %v406
    %v408 = vrot.slane %v385, %v407
    %v409 = vadd.f32 %v403, %v408
    %vm410 = vcmp.gt.f32.partialorder %v409, 0.0
    %v411 = vmul.f32 %v409, 0.01
    %v412 = vsel %vm410, %v409, %v411
    %v413 = vsel %vm197, %v412, -inf
    %414 = vmax.xlane.f32.xlu0 %v413
    %v415 = vpop.xlane.xlu0 %414
    %v416 = vsub.f32 %v412, %v415
    %v417 = vmul.f32 %v416, 1.442695
    %v418 = vpow.pop %v417
    %v419 = vsel %vm197, %v418, 0.0
    %420 = vadd.xlane.f32.xlu0 %v419
    %v421 = vpop.xlane.xlu0 %420
    %v422 = vpack.c.bf16 %v418, %v418
    %v423 = vpack.c.bf16 %v360, %v360
    %v425 = vsel %vm197, %v422, 0
    %v428 = vsel %vm212, %v423, 0
    %430 = vmatprep.subr.bf16.mxu0 0
    %431 = vmatpush1.bf16.msra.mxu0 0
    %432 = vmatprep.subr.bf16.mxu0 0
    %433 = vmatpush1.bf16.msra.mxu0 0
    %434 = vmatprep.subr.bf16.mxu0 0
    %435 = vmatpush1.bf16.msra.mxu0 0
    %436 = vmatprep.subr.bf16.mxu0 0
    %437 = vmatpush1.bf16.msra.mxu0 0
    %438 = vmatprep.subr.bf16.mxu0 0
    %439 = vmatpush1.bf16.msra.mxu0 0
    %440 = vmatprep.subr.bf16.mxu0 0
    %441 = vmatpush1.bf16.msra.mxu0 0
    %442 = vmatprep.subr.bf16.mxu0 0
    %443 = vmatpush1.bf16.msra.mxu0 0
    %444 = vmatprep.subr.bf16.mxu0 0
    %445 = vmatpush1.bf16.msra.mxu0 %v428
    %446 = vmatprep.subr.bf16.mxu0 0
    %447 = vmatpush2.bf16.msra.mxu0 0
    %448 = vmatprep.subr.bf16.mxu0 0
    %449 = vmatpush2.bf16.msra.mxu0 0
    %450 = vmatprep.subr.bf16.mxu0 0
    %451 = vmatpush2.bf16.msra.mxu0 0
    %452 = vmatprep.subr.bf16.mxu0 0
    %453 = vmatpush2.bf16.msra.mxu0 0
    %454 = vmatprep.subr.bf16.mxu0 0
    %455 = vmatpush2.bf16.msra.mxu0 0
    %456 = vmatprep.subr.bf16.mxu0 0
    %457 = vmatpush2.bf16.msra.mxu0 0
    %458 = vmatprep.subr.bf16.mxu0 0
    %459 = vmatpush2.bf16.msra.mxu0 0
    %460 = vmatprep.subr.bf16.mxu0 0
    %461 = vmatpush2.bf16.msra.mxu0 0
    %462 = vmatprep.mubr.bf16.mxu0 0
    %463 = vmatmul.mubr.bf16.gmra.mxu0 %v425
    %v464 = vpop.f32.mrf.mxu0
    %v465 = vadd.f32 0.0, %v464
    %v466 = vpop.f32.mrf.mxu0
    %v467 = vpop.f32.mrf.mxu0
    %v468 = vpop.f32.mrf.mxu0
    %469 = vdwg.mxu0
    %v470 = vrcp.pop %v421
    %v471 = vmul.f32 %v465, %v470
    %472 = vst [vmem:[#allocation8] sm:$0xff] %v471
    // Predicated region
    $region22: #{_gat_forward_padded.1} parent=1 // pred_check
      _
    $region23: #{_gat_forward_padded.1} parent=1 // pred_check_branch
      %474 = sbr.rel (0) target = $region25
    $region24: #{_gat_forward_padded.1} parent=1 // pred_region
      %s476 = ssub.s32 128, 128
      %477 = vsyncadd [#allocation5], %s476
      %s479 = sshll.u32 [#allocation8], 4
      %s480 = int_to_ptr.vmem [resolvable:$true] %s479
      %482 = dma.vmem_to_hbm [thread:$0]  %s480, 128, %s3, [#allocation5]
    $region25: #{_gat_forward_padded.1} parent=1 // pred_fallthru
      _
    // Predicated region
    $region26: #{_gat_forward_padded.1} parent=1 // pred_check
      _
    $region27: #{_gat_forward_padded.1} parent=1 // pred_check_branch
      %484 = sbr.rel (0) target = $region29
    $region28: #{_gat_forward_padded.1} parent=1 // pred_region
      %485 = dma.done [#allocation5], 128
    $region29: #{_gat_forward_padded.1} parent=1 // pred_fallthru
      _
    %486 = vsyncpa [#allocation4], 1
    %487 = vsyncpa [#allocation7], 1
    %488 = vsyncpa [#allocation5], 1

</llo_original>
